<compile_context>
chip_gen: v7x
topology: tpu7x:2x2x1
jax: 0.10.0
libtpu: 0.0.40
codegen_flags: <defaults>
</compile_context>

<pallas_src>
import functools

import jax
import jax.numpy as jnp
from jax.experimental import pallas as pl
from jax.experimental.pallas import tpu as pltpu

LANE = 128


def _round_up(x, m):
    return ((x + m - 1) // m) * m


def _pad2d(a, rows, cols):
    r, c = a.shape
    if r == rows and c == cols:
        return a
    return jnp.pad(a, ((0, rows - r), (0, cols - c)))


def _pick_row_tile(np_, target=512):
    """Largest 128-multiple power-of-two tile that divides Np, is <= target,
    and (when possible) leaves >= 2 row blocks so the parallel grid axis can be
    sharded across TensorCores (v7x megacore)."""
    cap = np_ if np_ <= LANE else np_ // 2
    cap = min(cap, target)
    for c in (1024, 512, 256, 128):
        if c <= cap and np_ % c == 0:
            return c
    return LANE


def _pick_k_tile(np_, target=512):
    for c in (512, 256, 128):
        if c <= min(target, np_) and np_ % c == 0:
            return c
    return LANE


# ---------------------------------------------------------------------------
# Fused layer kernel: out = act( H @ (X @ W + b) ), reduced over k blocks.
#   grid = (Np/tm, Np/tk); output block index is constant across k -> the f32
#   output block stays resident in VMEM and is used directly as accumulator.
# ---------------------------------------------------------------------------
def fused_layer_kernel(h_ref, x_ref, w_ref, b_ref, o_ref, *, apply_act):
    k = pl.program_id(1)

    @pl.when(k == 0)
    def _():
        o_ref[...] = jnp.zeros_like(o_ref)

    # Z tile for this k-block of nodes: (tk, Dout) = X[kblk] @ W + b  (f32).
    z = jnp.dot(x_ref[...], w_ref[...], preferred_element_type=jnp.float32)
    z = z + b_ref[...]

    # Accumulate H[iblk, kblk] @ Z into the resident output block.  Z is cast
    # to H's dtype so both MXU operands are bf16 (accumulation stays f32).
    o_ref[...] += jnp.dot(h_ref[...], z.astype(h_ref.dtype),
                          preferred_element_type=jnp.float32)

    @pl.when(k == pl.num_programs(1) - 1)
    def _():
        if apply_act:
            o_ref[...] = jnp.maximum(o_ref[...], 0.0)  # ReLU


def hgnn_layer(hp, xp, wp, bp, *, apply_act, tm, tk):
    Np = hp.shape[0]
    Din = xp.shape[1]
    Dout = wp.shape[1]
    return pl.pallas_call(
        functools.partial(fused_layer_kernel, apply_act=apply_act),
        out_shape=jax.ShapeDtypeStruct((Np, Dout), jnp.float32),
        grid_spec=pltpu.PrefetchScalarGridSpec(
            num_scalar_prefetch=0,
            grid=(Np // tm, Np // tk),
            in_specs=[
                pl.BlockSpec((tm, tk), lambda i, k: (i, k)),     # H tile (streamed)
                pl.BlockSpec((tk, Din), lambda i, k: (k, 0)),    # X rows for k block
                pl.BlockSpec((Din, Dout), lambda i, k: (0, 0)),  # W (resident)
                pl.BlockSpec((1, Dout), lambda i, k: (0, 0)),    # b (resident)
            ],
            out_specs=pl.BlockSpec((tm, Dout), lambda i, k: (i, 0)),
        ),
        # bf16 H at tm/tk <= 512 stays far under the default scoped VMEM on
        # v5e/v6e/v7x; raise vmem_limit_bytes only if tiles are pushed to 1024
        # in f32.
        compiler_params=pltpu.CompilerParams(
            dimension_semantics=("parallel", "arbitrary")),
    )(hp, xp, wp, bp)


# ---------------------------------------------------------------------------
# HGNN forward (num_layers == 2 path of the PyTorch module)
# ---------------------------------------------------------------------------
def hgnn_forward(X, H, params, *, tile_m=512, tile_k=512,
                 compute_dtype=jnp.bfloat16):
    w1, b1, w2, b2 = params
    N, in_dim = X.shape
    hid = w1.shape[1]
    out_dim = w2.shape[1]

    # Lane-dense feature widths: hidden/out dims padded to multiples of 128 so
    # output stores are unmasked vst.  Padded columns stay exactly zero.
    hid_p = _round_up(hid, LANE)
    out_p = _round_up(out_dim, LANE)

    # Decouple N padding from tile size: pad to a fixed 128 multiple, then pick
    # tm / tk independently so they divide Np.
    Np = _round_up(N, LANE)
    tm = _pick_row_tile(Np, tile_m)
    tk = _pick_k_tile(Np, tile_k)

    # ZERO-PADDING INVARIANT (required for exact per-k-block bias add): padded
    # H rows/cols, padded X rows and padded W/b columns are exactly zero.
    Hp = _pad2d(H, Np, Np).astype(compute_dtype)
    Xp = _pad2d(X, Np, in_dim).astype(compute_dtype)
    w1p = _pad2d(w1, in_dim, hid_p).astype(compute_dtype)
    w2p = _pad2d(w2, hid_p, out_p).astype(compute_dtype)
    b1p = _pad2d(b1.reshape(1, -1), 1, hid_p).astype(jnp.float32)
    b2p = _pad2d(b2.reshape(1, -1), 1, out_p).astype(jnp.float32)

    # X1 = relu(H @ (X W1 + b1));  X2 = H @ (X1 W2 + b2)
    X1 = hgnn_layer(Hp, Xp, w1p, b1p, apply_act=True, tm=tm, tk=tk)
    X2 = hgnn_layer(Hp, X1.astype(compute_dtype), w2p, b2p,
                    apply_act=False, tm=tm, tk=tk)
    return X2[:N, :out_dim]


if __name__ == "__main__":
    # Small, module-consistent shapes: N nodes, in_dim -> num_hidden -> out_dim.
    # N = 384 exercises a multi-block (3 x 3) grid with k-accumulation.
    N, in_dim, num_hidden, out_dim = 384, 32, 64, 16

    key = jax.random.PRNGKey(0)
    kx, kh, k1, k2, k3, k4 = jax.random.split(key, 6)

    X = jax.random.normal(kx, (N, in_dim), dtype=jnp.float32)
    # Dense representation of the sparse hypergraph propagation matrix H (N x N)
    H = (jax.random.uniform(kh, (N, N), dtype=jnp.float32) < 0.1).astype(jnp.float32)
    H = H / jnp.maximum(H.sum(axis=1, keepdims=True), 1.0)  # row-normalize

    # Deterministic parameter init (nn.Linear shapes)
    w1 = jax.random.normal(k1, (in_dim, num_hidden), dtype=jnp.float32) * (1.0 / in_dim ** 0.5)
    b1 = jax.random.normal(k2, (num_hidden,), dtype=jnp.float32) * 0.01
    w2 = jax.random.normal(k3, (num_hidden, out_dim), dtype=jnp.float32) * (1.0 / num_hidden ** 0.5)
    b2 = jax.random.normal(k4, (out_dim,), dtype=jnp.float32) * 0.01
    params = (w1, b1, w2, b2)

    # --- default bf16-compute path ---
    out = jax.block_until_ready(hgnn_forward(X, H, params))
    assert out.shape == (N, out_dim)

    # Tight check vs. a reference that applies the same bf16 casts (f32 accum).
    Hb = H.astype(jnp.bfloat16)
    Xb = X.astype(jnp.bfloat16)
    w1b = w1.astype(jnp.bfloat16)
    w2b = w2.astype(jnp.bfloat16)
    z1 = jnp.dot(Xb, w1b, preferred_element_type=jnp.float32) + b1
    x1 = jnp.maximum(jnp.dot(Hb, z1.astype(jnp.bfloat16),
                             preferred_element_type=jnp.float32), 0.0)
    z2 = jnp.dot(x1.astype(jnp.bfloat16), w2b,
                 preferred_element_type=jnp.float32) + b2
    ref_cast = jnp.dot(Hb, z2.astype(jnp.bfloat16),
                       preferred_element_type=jnp.float32)
    assert jnp.allclose(out, ref_cast, atol=2e-3, rtol=2e-3), \
        float(jnp.max(jnp.abs(out - ref_cast)))

    # Loose check vs. the pure f32 PyTorch-semantics reference (bf16 H/X/W
    # introduces ~0.2-0.5% relative error; accumulation stays f32).
    ref_f32 = jnp.maximum(H @ (X @ w1 + b1), 0.0)
    ref_f32 = H @ (ref_f32 @ w2 + b2)
    assert jnp.allclose(out, ref_f32, atol=5e-2, rtol=5e-2), \
        float(jnp.max(jnp.abs(out - ref_f32)))

    # --- optional full-f32 path still supported ---
    out_f32 = jax.block_until_ready(
        hgnn_forward(X, H, params, compute_dtype=jnp.float32))
    assert jnp.allclose(out_f32, ref_f32, atol=1e-4, rtol=1e-4), \
        float(jnp.max(jnp.abs(out_f32 - ref_f32)))

    print("KERNEL_OK")
</pallas_src>

<mosaic_0001>
module attributes {stable_mosaic.version = 11 : i64} {
  func.func @fused_layer_kernel(%arg0: i32, %arg1: i32, %arg2: memref<128x128xbf16, #tpu.memory_space<vmem>>, %arg3: memref<128x32xbf16, #tpu.memory_space<vmem>>, %arg4: memref<32x128xbf16, #tpu.memory_space<vmem>>, %arg5: memref<1x128xf32, #tpu.memory_space<vmem>>, %arg6: memref<128x128xf32, #tpu.memory_space<vmem>>) attributes {dimension_semantics = [#tpu.dimension_semantics<parallel>, #tpu.dimension_semantics<arbitrary>], iteration_bounds = array<i64: 3, 3>, scalar_prefetch = 0 : i64, scratch_operands = 0 : i64, tpu.core_type = #tpu.core_type<tc>, window_params = [{transform_indices = @transform_0, window_bounds = array<i64: 128, 128>}, {transform_indices = @transform_1, window_bounds = array<i64: 128, 32>}, {pipeline_mode = #tpu.pipeline_mode<synchronous>, transform_indices = @transform_2, window_bounds = array<i64: 32, 128>}, {pipeline_mode = #tpu.pipeline_mode<synchronous>, transform_indices = @transform_3, window_bounds = array<i64: 1, 128>}, {transform_indices = @transform_4, window_bounds = array<i64: 128, 128>}]} {
    %c0_i32 = arith.constant 0 : i32
    %0 = arith.cmpi eq, %arg1, %c0_i32 : i32
    %1 = arith.extui %0 : i1 to i32
    %c0_i32_0 = arith.constant 0 : i32
    %2 = arith.cmpi ne, %1, %c0_i32_0 : i32
    scf.if %2 {
      %cst_14 = arith.constant 0.000000e+00 : f32
      %18 = vector.broadcast %cst_14 : f32 to vector<128x128xf32>
      %c0_15 = arith.constant 0 : index
      %c0_16 = arith.constant 0 : index
      %19 = vector.load %arg6[%c0_15, %c0_16] : memref<128x128xf32, #tpu.memory_space<vmem>>, vector<128x128xf32>
      tpu.vector_store %arg6[%c0_15, %c0_16], %18 {strides = array<i32>} : memref<128x128xf32, #tpu.memory_space<vmem>>, vector<128x128xf32>,
    } else {
    }
    %c0 = arith.constant 0 : index
    %c0_1 = arith.constant 0 : index
    %3 = vector.load %arg3[%c0, %c0_1] : memref<128x32xbf16, #tpu.memory_space<vmem>>, vector<128x32xbf16>
    %c0_2 = arith.constant 0 : index
    %c0_3 = arith.constant 0 : index
    %4 = vector.load %arg4[%c0_2, %c0_3] : memref<32x128xbf16, #tpu.memory_space<vmem>>, vector<32x128xbf16>
    %cst = arith.constant dense<0.000000e+00> : vector<128x128xf32>
    %5 = tpu.matmul %3, %4, %cst {dimension_numbers = #tpu.dot_dimension_numbers<[1], [0], [0], [1], [0, 0, 1, 1], [], []>} : vector<128x32xbf16>, vector<32x128xbf16>, vector<128x128xf32> -> vector<128x128xf32>
    %c0_4 = arith.constant 0 : index
    %c0_5 = arith.constant 0 : index
    %6 = vector.load %arg5[%c0_4, %c0_5] : memref<1x128xf32, #tpu.memory_space<vmem>>, vector<1x128xf32>
    %7 = vector.broadcast %6 : vector<1x128xf32> to vector<128x128xf32>
    %8 = arith.addf %5, %7 : vector<128x128xf32>
    %c0_6 = arith.constant 0 : index
    %c0_7 = arith.constant 0 : index
    %9 = vector.load %arg6[%c0_6, %c0_7] : memref<128x128xf32, #tpu.memory_space<vmem>>, vector<128x128xf32>
    %c0_8 = arith.constant 0 : index
    %c0_9 = arith.constant 0 : index
    %10 = vector.load %arg2[%c0_8, %c0_9] : memref<128x128xbf16, #tpu.memory_space<vmem>>, vector<128x128xbf16>
    %11 = arith.truncf %8 : vector<128x128xf32> to vector<128x128xbf16>
    %cst_10 = arith.constant dense<0.000000e+00> : vector<128x128xf32>
    %12 = tpu.matmul %10, %11, %cst_10 {dimension_numbers = #tpu.dot_dimension_numbers<[1], [0], [0], [1], [0, 0, 1, 1], [], []>} : vector<128x128xbf16>, vector<128x128xbf16>, vector<128x128xf32> -> vector<128x128xf32>
    %13 = arith.addf %9, %12 : vector<128x128xf32>
    %c0_11 = arith.constant 0 : index
    %c0_12 = arith.constant 0 : index
    %14 = vector.load %arg6[%c0_11, %c0_12] : memref<128x128xf32, #tpu.memory_space<vmem>>, vector<128x128xf32>
    tpu.vector_store %arg6[%c0_11, %c0_12], %13 {strides = array<i32>} : memref<128x128xf32, #tpu.memory_space<vmem>>, vector<128x128xf32>,
    %c2_i32 = arith.constant 2 : i32
    %15 = arith.cmpi eq, %arg1, %c2_i32 : i32
    %16 = arith.extui %15 : i1 to i32
    %c0_i32_13 = arith.constant 0 : i32
    %17 = arith.cmpi ne, %16, %c0_i32_13 : i32
    scf.if %17 {
      %c0_14 = arith.constant 0 : index
      %c0_15 = arith.constant 0 : index
      %18 = vector.load %arg6[%c0_14, %c0_15] : memref<128x128xf32, #tpu.memory_space<vmem>>, vector<128x128xf32>
      %cst_16 = arith.constant 0.000000e+00 : f32
      %19 = vector.broadcast %cst_16 : f32 to vector<128x128xf32>
      %20 = arith.maximumf %18, %19 : vector<128x128xf32>
      %c0_17 = arith.constant 0 : index
      %c0_18 = arith.constant 0 : index
      %21 = vector.load %arg6[%c0_17, %c0_18] : memref<128x128xf32, #tpu.memory_space<vmem>>, vector<128x128xf32>
      tpu.vector_store %arg6[%c0_17, %c0_18], %20 {strides = array<i32>} : memref<128x128xf32, #tpu.memory_space<vmem>>, vector<128x128xf32>,
    } else {
    }
    return
  }
  func.func @transform_0(%arg0: i32, %arg1: i32) -> (i32, i32) {
    %c0_i32 = arith.constant 0 : i32
    return %arg0, %arg1 : i32, i32
  }
  func.func @transform_1(%arg0: i32, %arg1: i32) -> (i32, i32) {
    %c0_i32 = arith.constant 0 : i32
    %c0_i32_0 = arith.constant 0 : i32
    return %arg1, %c0_i32 : i32, i32
  }
  func.func @transform_2(%arg0: i32, %arg1: i32) -> (i32, i32) {
    %c0_i32 = arith.constant 0 : i32
    %c0_i32_0 = arith.constant 0 : i32
    %c0_i32_1 = arith.constant 0 : i32
    return %c0_i32, %c0_i32_0 : i32, i32
  }
  func.func @transform_3(%arg0: i32, %arg1: i32) -> (i32, i32) {
    %c0_i32 = arith.constant 0 : i32
    %c0_i32_0 = arith.constant 0 : i32
    %c0_i32_1 = arith.constant 0 : i32
    return %c0_i32, %c0_i32_0 : i32, i32
  }
  func.func @transform_4(%arg0: i32, %arg1: i32) -> (i32, i32) {
    %c0_i32 = arith.constant 0 : i32
    %c0_i32_0 = arith.constant 0 : i32
    return %arg0, %c0_i32 : i32, i32
  }
}

</mosaic_0001>

<llo_original>
// kernel: tpu_custom_call.1
$region0: #{tpu_custom_call.1}
  #allocation0 [shape = 'u32[]', space=smem, size = 0x4, offset = 0x4, fixed_abs, tag = 'smem constant byte address 0x4 - core index']
  #allocation1 [shape = 'u32[144,128]{1,0:T(1,128)}', space=vmem, size = 0x12000, scoped, tag = 'internal scratch']
  %s0 = inlined_call_operand.hbm [shape: bf16[384,384], index: 0, kind: input, shape index: {}]
  %s1 = inlined_call_operand.vmem [shape: bf16[384,32], index: 1, kind: input, shape index: {}]
  %s2 = inlined_call_operand.vmem [shape: bf16[32,128], index: 2, kind: input, shape index: {}]
  %s3 = inlined_call_operand.vmem [shape: f32[1,128], index: 3, kind: input, shape index: {}]
  %s4 = inlined_call_operand.hbm [shape: f32[384,128], index: 4, kind: output, shape index: {}]
  %s5 = sld [smem:[#allocation0]]
  $region61: #{tpu_custom_call.1} parent=0
    _
  %s7 = ssub.s32 1, %s5
  %s8 = scalar_select 0, %s7, %s5
  $region1: #{tpu_custom_call.1} parent=0
    #allocation2 [shape = 'u8[65536]{0}', space=vmem, size = 0x10000, scoped, tag = 'input window, operand 0']
    #allocation3 [shape = 's32[2]{0}', space=sflag, size = 0x8, scoped, tag = 'scoped memory for tpu_custom_call.1']
    #allocation4 [shape = 's32[2]{0}', space=sflag, size = 0x8, scoped, tag = 'scoped memory for tpu_custom_call.1']
    #allocation5 [shape = 'u8[131072]{0}', space=vmem, size = 0x20000, scoped, tag = 'output window, operand 0']
    %9 = vsyncpa [#allocation3], 0
    %s10 = scalar_lea.sflag [#allocation3], 1
    %11 = vsyncpa %s10, 0
    %12 = vsyncpa [#allocation4], 0
    %s13 = scalar_lea.sflag [#allocation4], 1
    %14 = vsyncpa %s13, 0
    loop: start=0, step=1, limit=11
    $region2: #{tpu_custom_call.1} parent=1 // loop_pre_header
      _
    $region3: #{tpu_custom_call.1} parent=1 // loop_header
      %s16 = sphi 0, %s20
      %p17 = scmp.ge.s32.totalorder %s16, 11
      %s23 = sphi 0, %s35
      %s24 = sphi 0, %s31
      %s25 = sphi 0, %s23
      %s26 = sphi 0, %s24
      %s27 = sphi 0, %s25
      %s28 = sphi 0, %s26
      %s40 = sphi 0, %s42
      %s43 = sphi 0, %s40
      %s44 = sphi 0, %s43
      %s60 = sphi 0, %s44
      %s66 = sphi 0, %s68
      %s69 = sphi 0, %s66
      %s70 = sphi 0, %s69
      %s86 = sphi 0, %s70
      %s90 = sphi 0, %s90
      %s92 = sphi 0, %s90
      %s93 = sphi 0, %s92
      %s107 = sphi 0, %s93
      %s111 = sphi 0, %s111
      %s113 = sphi 0, %s111
      %s114 = sphi 0, %s113
      %s128 = sphi 0, %s114
      %s134 = sphi 0, %s136
      %s137 = sphi 0, %s134
      %s138 = sphi 0, %s137
      %s154 = sphi 0, %s138
    $region4: #{tpu_custom_call.1} parent=1 // loop_header_branch
      %19 = sbr.rel (%p17) target = $region8
    $region5: #{tpu_custom_call.1} parent=1 // loop_body
      %s21 = ssub.s32 %s16, 1
      %s22 = ssub.s32 %s16, 2
      %s29 = sadd.s32 1, %s24
      %p30 = scmp.ge.s32.totalorder %s29, 3
      %s31 = scalar_select %p30, 0, %s29
      %s32 = sadd.s32 1, %s23
      %s33 = scalar_select %p30, %s32, %s23
      %p34 = scmp.ge.s32.totalorder %s33, 3
      %s35 = scalar_select %p34, 0, %s33
      %s36 = ssub.s32 %s23, %s35
      %s37 = ssub.s32 %s24, %s31
      %s38 = sor.u32 %s36, %s37
      %p39 = scmp.eq.s32.totalorder %s38, 0
      %s41 = sadd.s32 %s40, 1
      %s42 = scalar_select %p39, %s40, %s41
      %p45 = pneg %p39
      %p46 = scmp.eq.s32.totalorder %s16, 8
      %p47 = por %p45, %p46
      %p48 = scmp.ne.s32.totalorder %s40, %s43
      %p49 = scmp.eq.s32.totalorder %s16, 0
      %p50 = por %p48, %p49
      %p51 = scmp.ne.s32.totalorder %s40, %s43
      %p52 = scmp.eq.s32.totalorder %s21, 8
      %p53 = por %p51, %p52
      %p54 = scmp.ne.s32.totalorder %s43, %s44
      %p55 = scmp.eq.s32.totalorder %s21, 0
      %p56 = por %p54, %p55
      %p57 = scmp.ne.s32.totalorder %s43, %s44
      %p58 = scmp.eq.s32.totalorder %s22, 8
      %p59 = por %p57, %p58
      %p61 = scmp.ne.s32.totalorder %s44, %s60
      %p62 = scmp.eq.s32.totalorder %s22, 0
      %p63 = por %p61, %p62
      %s64 = ssub.s32 %s24, %s31
      %p65 = scmp.eq.s32.totalorder %s64, 0
      %s67 = sadd.s32 %s66, 1
      %s68 = scalar_select %p65, %s66, %s67
      %p71 = pneg %p65
      %p72 = scmp.eq.s32.totalorder %s16, 8
      %p73 = por %p71, %p72
      %p74 = scmp.ne.s32.totalorder %s66, %s69
      %p75 = scmp.eq.s32.totalorder %s16, 0
      %p76 = por %p74, %p75
      %p77 = scmp.ne.s32.totalorder %s66, %s69
      %p78 = scmp.eq.s32.totalorder %s21, 8
      %p79 = por %p77, %p78
      %p80 = scmp.ne.s32.totalorder %s69, %s70
      %p81 = scmp.eq.s32.totalorder %s21, 0
      %p82 = por %p80, %p81
      %p83 = scmp.ne.s32.totalorder %s69, %s70
      %p84 = scmp.eq.s32.totalorder %s22, 8
      %p85 = por %p83, %p84
      %p87 = scmp.ne.s32.totalorder %s70, %s86
      %p88 = scmp.eq.s32.totalorder %s22, 0
      %p89 = por %p87, %p88
      %s91 = sadd.s32 %s90, 1
      %p94 = scmp.eq.s32.totalorder %s16, 8
      %p95 = scmp.ne.s32.totalorder %s90, %s92
      %p96 = scmp.eq.s32.totalorder %s16, 0
      %p97 = por %p95, %p96
      %p98 = scmp.ne.s32.totalorder %s90, %s92
      %p99 = scmp.eq.s32.totalorder %s21, 8
      %p100 = por %p98, %p99
      %p101 = scmp.ne.s32.totalorder %s92, %s93
      %p102 = scmp.eq.s32.totalorder %s21, 0
      %p103 = por %p101, %p102
      %p104 = scmp.ne.s32.totalorder %s92, %s93
      %p105 = scmp.eq.s32.totalorder %s22, 8
      %p106 = por %p104, %p105
      %p108 = scmp.ne.s32.totalorder %s93, %s107
      %p109 = scmp.eq.s32.totalorder %s22, 0
      %p110 = por %p108, %p109
      %s112 = sadd.s32 %s111, 1
      %p115 = scmp.eq.s32.totalorder %s16, 8
      %p116 = scmp.ne.s32.totalorder %s111, %s113
      %p117 = scmp.eq.s32.totalorder %s16, 0
      %p118 = por %p116, %p117
      %p119 = scmp.ne.s32.totalorder %s111, %s113
      %p120 = scmp.eq.s32.totalorder %s21, 8
      %p121 = por %p119, %p120
      %p122 = scmp.ne.s32.totalorder %s113, %s114
      %p123 = scmp.eq.s32.totalorder %s21, 0
      %p124 = por %p122, %p123
      %p125 = scmp.ne.s32.totalorder %s113, %s114
      %p126 = scmp.eq.s32.totalorder %s22, 8
      %p127 = por %p125, %p126
      %p129 = scmp.ne.s32.totalorder %s114, %s128
      %p130 = scmp.eq.s32.totalorder %s22, 0
      %p131 = por %p129, %p130
      %s132 = ssub.s32 %s23, %s35
      %p133 = scmp.eq.s32.totalorder %s132, 0
      %s135 = sadd.s32 %s134, 1
      %s136 = scalar_select %p133, %s134, %s135
      %p139 = pneg %p133
      %p140 = scmp.eq.s32.totalorder %s16, 8
      %p141 = por %p139, %p140
      %p142 = scmp.ne.s32.totalorder %s134, %s137
      %p143 = scmp.eq.s32.totalorder %s16, 0
      %p144 = por %p142, %p143
      %p145 = scmp.ne.s32.totalorder %s134, %s137
      %p146 = scmp.eq.s32.totalorder %s21, 8
      %p147 = por %p145, %p146
      %p148 = scmp.ne.s32.totalorder %s137, %s138
      %p149 = scmp.eq.s32.totalorder %s21, 0
      %p150 = por %p148, %p149
      %p151 = scmp.ne.s32.totalorder %s137, %s138
      %p152 = scmp.eq.s32.totalorder %s22, 8
      %p153 = por %p151, %p152
      %p155 = scmp.ne.s32.totalorder %s138, %s154
      %p156 = scmp.eq.s32.totalorder %s22, 0
      %p157 = por %p155, %p156
      %p158 = scmp.le.s32.totalorder 1, %s16
      %p159 = scmp.lt.s32.totalorder %s16, 10
      %p160 = pnand %p158, %p159
      %p161 = pneg %p160
      // Predicated region
      $region9: #{tpu_custom_call.1} parent=5 // pred_check
        _
      $region10: #{tpu_custom_call.1} parent=5 // pred_check_branch
        %163 = sbr.rel (%p160) target = $region12
      $region11: #{tpu_custom_call.1} parent=5 // pred_region
        %s164 = ssub.s32 %s16, 1
        // Predicated region
        $region13: #{tpu_custom_call.1} parent=11 // pred_check
          %p165 = pneg %p103
        $region14: #{tpu_custom_call.1} parent=11 // pred_check_branch
          %167 = sbr.rel (%p165) target = $region16
        $region15: #{tpu_custom_call.1} parent=11 // pred_region
          _
        $region16: #{tpu_custom_call.1} parent=11 // pred_fallthru
          _
        // Predicated region
        $region17: #{tpu_custom_call.1} parent=11 // pred_check
          %p168 = pneg %p124
        $region18: #{tpu_custom_call.1} parent=11 // pred_check_branch
          %170 = sbr.rel (%p168) target = $region20
        $region19: #{tpu_custom_call.1} parent=11 // pred_region
          _
        $region20: #{tpu_custom_call.1} parent=11 // pred_fallthru
          _
      $region12: #{tpu_custom_call.1} parent=5 // pred_fallthru
        _
      %p171 = scmp.lt.s32.totalorder %s16, 9
      // Predicated region
      $region21: #{tpu_custom_call.1} parent=5 // pred_check
        %p172 = pneg %p171
      $region22: #{tpu_custom_call.1} parent=5 // pred_check_branch
        %174 = sbr.rel (%p172) target = $region24
      $region23: #{tpu_custom_call.1} parent=5 // pred_region
        // Predicated region
        $region25: #{tpu_custom_call.1} parent=23 // pred_check
          %p175 = pneg %p50
        $region26: #{tpu_custom_call.1} parent=23 // pred_check_branch
          %177 = sbr.rel (%p175) target = $region28
        $region27: #{tpu_custom_call.1} parent=23 // pred_region
          %s178 = sand.u32 %s40, 1
          %s179 = scalar_lea.sflag [#allocation3], %s178
          %s180 = sand.u32 %s40, 1
          %s181 = smul.addr %s180, 64
          %s182 = scalar_lea.vmem [#allocation2], %s181
          %s183 = smul.u32 16, %s23
          %s185 = ssub.s32 1024, 1024
          %186 = vsyncadd %s179, %s185
          %s187 = smul.addr %s183, 3
          %s188 = sadd.s32 %s24, %s187
          %s189 = smul.addr %s188, 64
          %s190 = scalar_lea.hbm %s0, %s189
          %s191 = sshll.u32 %s182, 4
          %s192 = int_to_ptr.vmem [resolvable:$true] %s191
          %197 = dma.hbm_to_vmem [thread:$0]  %s190, 1024, %s192, %s179, 192, 64, 4
        $region28: #{tpu_custom_call.1} parent=23 // pred_fallthru
          _
        // Predicated region
        $region29: #{tpu_custom_call.1} parent=23 // pred_check
          %p198 = pneg %p76
        $region30: #{tpu_custom_call.1} parent=23 // pred_check_branch
          %200 = sbr.rel (%p198) target = $region32
        $region31: #{tpu_custom_call.1} parent=23 // pred_region
          %s201 = smul.u32 16, %s24
          %p202 = scmp.lt.s32.totalorder %s201, 47
          %s203 = scalar_select %p202, %s201, 47
          %s204 = smul.addr %s203, 4
          %s205 = scalar_lea.vmem %s1, %s204
          %s206 = smul.u32 16, %s24
        $region32: #{tpu_custom_call.1} parent=23 // pred_fallthru
          _
      $region24: #{tpu_custom_call.1} parent=5 // pred_fallthru
        _
      %p207 = scmp.le.s32.totalorder 1, %s16
      %p208 = scmp.lt.s32.totalorder %s16, 10
      %p209 = pnand %p207, %p208
      %p210 = pneg %p209
      // Predicated region
      $region33: #{tpu_custom_call.1} parent=5 // pred_check
        _
      $region34: #{tpu_custom_call.1} parent=5 // pred_check_branch
        %212 = sbr.rel (%p209) target = $region36
      $region35: #{tpu_custom_call.1} parent=5 // pred_region
        %s213 = ssub.s32 %s16, 1
        %s214 = sand.u32 %s43, 1
        %s215 = scalar_lea.sflag [#allocation3], %s214
        %s216 = sand.u32 %s43, 1
        %s217 = smul.addr %s216, 64
        %s218 = scalar_lea.vmem [#allocation2], %s217
        // Predicated region
        $region37: #{tpu_custom_call.1} parent=35 // pred_check
          %p219 = pneg %p56
        $region38: #{tpu_custom_call.1} parent=35 // pred_check_branch
          %221 = sbr.rel (%p219) target = $region40
        $region39: #{tpu_custom_call.1} parent=35 // pred_region
          %222 = dma.done %s215, 1024
        $region40: #{tpu_custom_call.1} parent=35 // pred_fallthru
          _
        %s223 = sand.u32 %s43, 1
        %s224 = scalar_lea.sflag [#allocation3], %s223
        %s225 = sand.u32 %s43, 1
        %s226 = smul.addr %s225, 64
        %s227 = scalar_lea.vmem [#allocation2], %s226
        %p228 = pneg %p56
        %p229 = pneg %p53
        %s230 = smul.u32 16, %s26
        %p231 = scmp.lt.s32.totalorder %s230, 47
        %s232 = scalar_select %p231, %s230, 47
        %s233 = smul.addr %s232, 4
        %s234 = scalar_lea.vmem %s1, %s233
        %p235 = pneg %p82
        %p236 = pneg %p79
        %p237 = pneg %p103
        %p238 = pneg %p100
        %p239 = pneg %p124
        %p240 = pneg %p121
        %p241 = pneg %p150
        %p242 = pneg %p147
        %s243 = sand.u32 %s137, 1
        %s244 = scalar_lea.sflag [#allocation4], %s243
        %s245 = sand.u32 %s137, 1
        %s246 = smul.addr %s245, 128
        %s247 = scalar_lea.vmem [#allocation5], %s246
        %s248 = smul.u32 16, %s25
        %s249 = smul.u32 16, %s26
        %p250 = scmp.lt.s32.totalorder %s249, 47
        %s251 = scalar_select %p250, %s249, 47
        %s252 = smul.addr %s251, 4
        %s253 = scalar_lea.vmem %s1, %s252
        %s254 = smul.u32 16, %s26
        %s255 = smul.u32 16, %s25
        %p257 = scmp.eq.s32.totalorder %s26, 0
        // Predicated region
        $region41: #{tpu_custom_call.1} parent=35 // pred_check
          %p258 = pneg %p257
        $region42: #{tpu_custom_call.1} parent=35 // pred_check_branch
          %260 = sbr.rel (%p258) target = $region44
        $region43: #{tpu_custom_call.1} parent=35 // pred_region
          %261 = vst [vmem:[%s247] sm:$0xff] 0.0
          %262 = vst [vmem:[%s247 + $0x8] sm:$0xff] 0.0
          %263 = vst [vmem:[%s247 + $0x10] sm:$0xff] 0.0
          %264 = vst [vmem:[%s247 + $0x18] sm:$0xff] 0.0
          %265 = vst [vmem:[%s247 + $0x20] sm:$0xff] 0.0
          %266 = vst [vmem:[%s247 + $0x28] sm:$0xff] 0.0
          %267 = vst [vmem:[%s247 + $0x30] sm:$0xff] 0.0
          %268 = vst [vmem:[%s247 + $0x38] sm:$0xff] 0.0
          %269 = vst [vmem:[%s247 + $0x40] sm:$0xff] 0.0
          %270 = vst [vmem:[%s247 + $0x48] sm:$0xff] 0.0
          %271 = vst [vmem:[%s247 + $0x50] sm:$0xff] 0.0
          %272 = vst [vmem:[%s247 + $0x58] sm:$0xff] 0.0
          %273 = vst [vmem:[%s247 + $0x60] sm:$0xff] 0.0
          %274 = vst [vmem:[%s247 + $0x68] sm:$0xff] 0.0
          %275 = vst [vmem:[%s247 + $0x70] sm:$0xff] 0.0
          %276 = vst [vmem:[%s247 + $0x78] sm:$0xff] 0.0
        $region44: #{tpu_custom_call.1} parent=35 // pred_fallthru
          _
        %v277 = vld [vmem:[%s253] sm:$0xf]
        %v278 = vld [vmem:[%s253 + $0x4] sm:$0xf]
        %v279 = vld [vmem:[%s253 + $0x8] sm:$0xf]
        %v280 = vld [vmem:[%s253 + $0xc] sm:$0xf]
        %v281 = vld [vmem:[%s253 + $0x10] sm:$0xf]
        %v282 = vld [vmem:[%s253 + $0x14] sm:$0xf]
        %v283 = vld [vmem:[%s253 + $0x18] sm:$0xf]
        %v284 = vld [vmem:[%s253 + $0x1c] sm:$0xf]
        %v285 = vld [vmem:[%s253 + $0x20] sm:$0xf]
        %v286 = vld [vmem:[%s253 + $0x24] sm:$0xf]
        %v287 = vld [vmem:[%s253 + $0x28] sm:$0xf]
        %v288 = vld [vmem:[%s253 + $0x2c] sm:$0xf]
        %v289 = vld [vmem:[%s253 + $0x30] sm:$0xf]
        %v290 = vld [vmem:[%s253 + $0x34] sm:$0xf]
        %v291 = vld [vmem:[%s253 + $0x38] sm:$0xf]
        %v292 = vld [vmem:[%s253 + $0x3c] sm:$0xf]
        %v293 = vld [vmem:[%s2] sm:$0xf]
        %v294 = vld [vmem:[%s2 + $0x4] sm:$0xf]
        %v295 = vld [vmem:[%s2 + $0x8] sm:$0xf]
        %v296 = vld [vmem:[%s2 + $0xc] sm:$0xf]
        %v297 = vld [vmem:[%s3] sm:$0x1]
        %v299 = vlaneseq
        %v300 = vshrl.u32 %v299, 7
        %v301 = vsub.s32 0, %v300
        %v302 = vrot.slane %v297, %v301
        %v320 = vunpack.c.l.b16 %v277
        %v321 = vunpack.c.l.b16 %v278
        %v322 = vunpack.c.l.b16 %v279
        %v323 = vunpack.c.l.b16 %v280
        %v324 = vunpack.c.l.b16 %v281
        %v325 = vunpack.c.l.b16 %v282
        %v326 = vunpack.c.l.b16 %v283
        %v327 = vunpack.c.l.b16 %v284
        %v328 = vunpack.c.l.b16 %v285
        %v329 = vunpack.c.l.b16 %v286
        %v330 = vunpack.c.l.b16 %v287
        %v331 = vunpack.c.l.b16 %v288
        %v332 = vunpack.c.l.b16 %v289
        %v333 = vunpack.c.l.b16 %v290
        %v334 = vunpack.c.l.b16 %v291
        %v335 = vunpack.c.l.b16 %v292
        %v336 = vpack.c.b16 %v321, %v320
        %v337 = vpack.c.b16 %v323, %v322
        %v338 = vpack.c.b16 %v325, %v324
        %v339 = vpack.c.b16 %v327, %v326
        %v340 = vpack.c.b16 %v329, %v328
        %v341 = vpack.c.b16 %v331, %v330
        %v342 = vpack.c.b16 %v333, %v332
        %v343 = vpack.c.b16 %v335, %v334
        %v348 = vunpack.c.l.b16 %v293
        %v349 = vunpack.c.l.b16 %v294
        %v350 = vunpack.c.l.b16 %v295
        %v351 = vunpack.c.l.b16 %v296
        %v352 = vpack.c.b16 %v349, %v348
        %v353 = vpack.c.b16 %v351, %v350
        %vm356 = vcmask 261120
        %v358 = vsel %vm356, %v336, 0
        %v361 = vsel %vm356, %v337, 0
        %v364 = vsel %vm356, %v338, 0
        %v367 = vsel %vm356, %v339, 0
        %v370 = vsel %vm356, %v340, 0
        %v373 = vsel %vm356, %v341, 0
        %v376 = vsel %vm356, %v342, 0
        %v379 = vsel %vm356, %v343, 0
        %381 = vmatprep.subr.bf16.mxu0 0
        %382 = vmatpush1.bf16.msra.mxu0 %v352
        %383 = vmatprep.subr.bf16.mxu0 0
        %384 = vmatpush1.bf16.msra.mxu0 %v353
        %385 = vmatprep.subr.bf16.mxu0 0
        %386 = vmatpush1.bf16.msra.mxu0 0
        %387 = vmatprep.subr.bf16.mxu0 0
        %388 = vmatpush1.bf16.msra.mxu0 0
        %389 = vmatprep.subr.bf16.mxu0 0
        %390 = vmatpush1.bf16.msra.mxu0 0
        %391 = vmatprep.subr.bf16.mxu0 0
        %392 = vmatpush1.bf16.msra.mxu0 0
        %393 = vmatprep.subr.bf16.mxu0 0
        %394 = vmatpush1.bf16.msra.mxu0 0
        %395 = vmatprep.subr.bf16.mxu0 0
        %396 = vmatpush1.bf16.msra.mxu0 0
        %397 = vmatprep.subr.bf16.mxu0 0
        %398 = vmatpush1.bf16.msra.mxu0 0
        %399 = vmatprep.subr.bf16.mxu0 0
        %400 = vmatpush1.bf16.msra.mxu0 0
        %401 = vmatprep.subr.bf16.mxu0 0
        %402 = vmatpush1.bf16.msra.mxu0 0
        %403 = vmatprep.subr.bf16.mxu0 0
        %404 = vmatpush1.bf16.msra.mxu0 0
        %405 = vmatprep.subr.bf16.mxu0 0
        %406 = vmatpush1.bf16.msra.mxu0 0
        %407 = vmatprep.subr.bf16.mxu0 0
        %408 = vmatpush1.bf16.msra.mxu0 0
        %409 = vmatprep.subr.bf16.mxu0 0
        %410 = vmatpush1.bf16.msra.mxu0 0
        %411 = vmatprep.subr.bf16.mxu0 0
        %412 = vmatpush1.bf16.msra.mxu0 0
        %413 = vmatprep.mubr.bf16.mxu0 0
        %414 = vmatmul.mubr.bf16.gmra.mrb[0].mxu0 %v358
        %v415 = vpop.f32.mrb[0].mxu0
        %v416 = vadd.f32 %v302, %v415
        %v417 = vpop.f32.mrb[0].mxu0
        %v418 = vpop.f32.mrb[0].mxu0
        %v419 = vadd.f32 %v302, %v418
        %v420 = vpop.f32.mrb[0].mxu0
        %421 = vmatprep.mubr.bf16.mxu0 0
        %422 = vmatmul.mubr.bf16.gmra.mrb[0].mxu0 %v361
        %v423 = vpop.f32.mrb[0].mxu0
        %v424 = vadd.f32 %v302, %v423
        %v425 = vpop.f32.mrb[0].mxu0
        %v426 = vpop.f32.mrb[0].mxu0
        %v427 = vadd.f32 %v302, %v426
        %v428 = vpop.f32.mrb[0].mxu0
        %429 = vmatprep.mubr.bf16.mxu0 0
        %430 = vmatmul.mubr.bf16.gmra.mrb[0].mxu0 %v364
        %v431 = vpop.f32.mrb[0].mxu0
        %v432 = vadd.f32 %v302, %v431
        %v433 = vpop.f32.mrb[0].mxu0
        %v434 = vpop.f32.mrb[0].mxu0
        %v435 = vadd.f32 %v302, %v434
        %v436 = vpop.f32.mrb[0].mxu0
        %437 = vmatprep.mubr.bf16.mxu0 0
        %438 = vmatmul.mubr.bf16.gmra.mrb[0].mxu0 %v367
        %v439 = vpop.f32.mrb[0].mxu0
        %v440 = vadd.f32 %v302, %v439
        %v441 = vpop.f32.mrb[0].mxu0
        %v442 = vpop.f32.mrb[0].mxu0
        %v443 = vadd.f32 %v302, %v442
        %v444 = vpop.f32.mrb[0].mxu0
        %445 = vmatprep.mubr.bf16.mxu0 0
        %446 = vmatmul.mubr.bf16.gmra.mrb[0].mxu0 %v370
        %v447 = vpop.f32.mrb[0].mxu0
        %v448 = vadd.f32 %v302, %v447
        %v449 = vpop.f32.mrb[0].mxu0
        %v450 = vpop.f32.mrb[0].mxu0
        %v451 = vadd.f32 %v302, %v450
        %v452 = vpop.f32.mrb[0].mxu0
        %453 = vmatprep.mubr.bf16.mxu0 0
        %454 = vmatmul.mubr.bf16.gmra.mrb[0].mxu0 %v373
        %v455 = vpop.f32.mrb[0].mxu0
        %v456 = vadd.f32 %v302, %v455
        %v457 = vpop.f32.mrb[0].mxu0
        %v458 = vpop.f32.mrb[0].mxu0
        %v459 = vadd.f32 %v302, %v458
        %v460 = vpop.f32.mrb[0].mxu0
        %461 = vmatprep.mubr.bf16.mxu0 0
        %462 = vmatmul.mubr.bf16.gmra.mrb[0].mxu0 %v376
        %v463 = vpop.f32.mrb[0].mxu0
        %v464 = vadd.f32 %v302, %v463
        %v465 = vpop.f32.mrb[0].mxu0
        %v466 = vpop.f32.mrb[0].mxu0
        %v467 = vadd.f32 %v302, %v466
        %v468 = vpop.f32.mrb[0].mxu0
        %469 = vmatprep.mubr.bf16.mxu0 0
        %470 = vmatmul.mubr.bf16.gmra.mrb[0].mxu0 %v379
        %v471 = vpop.f32.mrb[0].mxu0
        %v472 = vadd.f32 %v302, %v471
        %v473 = vpop.f32.mrb[0].mxu0
        %v474 = vpop.f32.mrb[0].mxu0
        %v475 = vadd.f32 %v302, %v474
        %v476 = vpop.f32.mrb[0].mxu0
        %477 = vdwg.mxu0
        %v478 = vld [vmem:[%s247] sm:$0xff]
        %v479 = vld [vmem:[%s247 + $0x8] sm:$0xff]
        %v480 = vld [vmem:[%s247 + $0x10] sm:$0xff]
        %v481 = vld [vmem:[%s247 + $0x18] sm:$0xff]
        %v482 = vld [vmem:[%s247 + $0x20] sm:$0xff]
        %v483 = vld [vmem:[%s247 + $0x28] sm:$0xff]
        %v484 = vld [vmem:[%s247 + $0x30] sm:$0xff]
        %v485 = vld [vmem:[%s247 + $0x38] sm:$0xff]
        %v486 = vld [vmem:[%s247 + $0x40] sm:$0xff]
        %v487 = vld [vmem:[%s247 + $0x48] sm:$0xff]
        %v488 = vld [vmem:[%s247 + $0x50] sm:$0xff]
        %v489 = vld [vmem:[%s247 + $0x58] sm:$0xff]
        %v490 = vld [vmem:[%s247 + $0x60] sm:$0xff]
        %v491 = vld [vmem:[%s247 + $0x68] sm:$0xff]
        %v492 = vld [vmem:[%s247 + $0x70] sm:$0xff]
        %v493 = vld [vmem:[%s247 + $0x78] sm:$0xff]
        %v494 = vld [vmem:[%s218] sm:$0xf]
        %v495 = vld [vmem:[%s218 + $0x4] sm:$0xf]
        %v496 = vld [vmem:[%s218 + $0x8] sm:$0xf]
        %v497 = vld [vmem:[%s218 + $0xc] sm:$0xf]
        %v498 = vld [vmem:[%s218 + $0x10] sm:$0xf]
        %v499 = vld [vmem:[%s218 + $0x14] sm:$0xf]
        %v500 = vld [vmem:[%s218 + $0x18] sm:$0xf]
        %v501 = vld [vmem:[%s218 + $0x1c] sm:$0xf]
        %v502 = vld [vmem:[%s218 + $0x20] sm:$0xf]
        %v503 = vld [vmem:[%s218 + $0x24] sm:$0xf]
        %v504 = vld [vmem:[%s218 + $0x28] sm:$0xf]
        %v505 = vld [vmem:[%s218 + $0x2c] sm:$0xf]
        %v506 = vld [vmem:[%s218 + $0x30] sm:$0xf]
        %v507 = vld [vmem:[%s218 + $0x34] sm:$0xf]
        %v508 = vld [vmem:[%s218 + $0x38] sm:$0xf]
        %v509 = vld [vmem:[%s218 + $0x3c] sm:$0xf]
        %v510 = vpack.c.bf16 %v419, %v416
        %v511 = vpack.c.bf16 %v427, %v424
        %v512 = vpack.c.bf16 %v435, %v432
        %v513 = vpack.c.bf16 %v443, %v440
        %v514 = vpack.c.bf16 %v451, %v448
        %v515 = vpack.c.bf16 %v459, %v456
        %v516 = vpack.c.bf16 %v467, %v464
        %v517 = vpack.c.bf16 %v475, %v472
        %v534 = vunpack.c.l.b16 %v494
        %v535 = vunpack.c.l.b16 %v495
        %v536 = vunpack.c.l.b16 %v496
        %v537 = vunpack.c.l.b16 %v497
        %v538 = vunpack.c.l.b16 %v498
        %v539 = vunpack.c.l.b16 %v499
        %v540 = vunpack.c.l.b16 %v500
        %v541 = vunpack.c.l.b16 %v501
        %v542 = vunpack.c.l.b16 %v502
        %v543 = vunpack.c.l.b16 %v503
        %v544 = vunpack.c.l.b16 %v504
        %v545 = vunpack.c.l.b16 %v505
        %v546 = vunpack.c.l.b16 %v506
        %v547 = vunpack.c.l.b16 %v507
        %v548 = vunpack.c.l.b16 %v508
        %v549 = vunpack.c.l.b16 %v509
        %v550 = vpack.c.b16 %v535, %v534
        %v551 = vpack.c.b16 %v537, %v536
        %v552 = vpack.c.b16 %v539, %v538
        %v553 = vpack.c.b16 %v541, %v540
        %v554 = vpack.c.b16 %v543, %v542
        %v555 = vpack.c.b16 %v545, %v544
        %v556 = vpack.c.b16 %v547, %v546
        %v557 = vpack.c.b16 %v549, %v548
        %566 = vmatprep.subr.bf16.mxu0 0
        %567 = vmatpush1.bf16.msra.mxu0 %v510
        %568 = vmatprep.subr.bf16.mxu0 0
        %569 = vmatpush1.bf16.msra.mxu0 %v511
        %570 = vmatprep.subr.bf16.mxu0 0
        %571 = vmatpush1.bf16.msra.mxu0 %v512
        %572 = vmatprep.subr.bf16.mxu0 0
        %573 = vmatpush1.bf16.msra.mxu0 %v513
        %574 = vmatprep.subr.bf16.mxu0 0
        %575 = vmatpush1.bf16.msra.mxu0 %v514
        %576 = vmatprep.subr.bf16.mxu0 0
        %577 = vmatpush1.bf16.msra.mxu0 %v515
        %578 = vmatprep.subr.bf16.mxu0 0
        %579 = vmatpush1.bf16.msra.mxu0 %v516
        %580 = vmatprep.subr.bf16.mxu0 0
        %581 = vmatpush1.bf16.msra.mxu0 %v517
        %582 = vmatprep.subr.bf16.mxu0 0
        %583 = vmatpush1.bf16.msra.mxu0 0
        %584 = vmatprep.subr.bf16.mxu0 0
        %585 = vmatpush1.bf16.msra.mxu0 0
        %586 = vmatprep.subr.bf16.mxu0 0
        %587 = vmatpush1.bf16.msra.mxu0 0
        %588 = vmatprep.subr.bf16.mxu0 0
        %589 = vmatpush1.bf16.msra.mxu0 0
        %590 = vmatprep.subr.bf16.mxu0 0
        %591 = vmatpush1.bf16.msra.mxu0 0
        %592 = vmatprep.subr.bf16.mxu0 0
        %593 = vmatpush1.bf16.msra.mxu0 0
        %594 = vmatprep.subr.bf16.mxu0 0
        %595 = vmatpush1.bf16.msra.mxu0 0
        %596 = vmatprep.subr.bf16.mxu0 0
        %597 = vmatpush1.bf16.msra.mxu0 0
        %598 = vmatprep.mubr.bf16.mxu0 0
        %599 = vmatmul.mubr.bf16.gmra.mrb[0].mxu0 %v550
        %v600 = vpop.f32.mrb[0].mxu0
        %v601 = vadd.f32 0.0, %v600
        %v602 = vpop.f32.mrb[0].mxu0
        %v603 = vpop.f32.mrb[0].mxu0
        %v604 = vadd.f32 0.0, %v603
        %v605 = vpop.f32.mrb[0].mxu0
        %606 = vmatprep.mubr.bf16.mxu0 0
        %607 = vmatmul.mubr.bf16.gmra.mrb[0].mxu0 %v551
        %v608 = vpop.f32.mrb[0].mxu0
        %v609 = vadd.f32 0.0, %v608
        %v610 = vpop.f32.mrb[0].mxu0
        %v611 = vpop.f32.mrb[0].mxu0
        %v612 = vadd.f32 0.0, %v611
        %v613 = vpop.f32.mrb[0].mxu0
        %614 = vmatprep.mubr.bf16.mxu0 0
        %615 = vmatmul.mubr.bf16.gmra.mrb[0].mxu0 %v552
        %v616 = vpop.f32.mrb[0].mxu0
        %v617 = vadd.f32 0.0, %v616
        %v618 = vpop.f32.mrb[0].mxu0
        %v619 = vpop.f32.mrb[0].mxu0
        %v620 = vadd.f32 0.0, %v619
        %v621 = vpop.f32.mrb[0].mxu0
        %622 = vmatprep.mubr.bf16.mxu0 0
        %623 = vmatmul.mubr.bf16.gmra.mrb[0].mxu0 %v553
        %v624 = vpop.f32.mrb[0].mxu0
        %v625 = vadd.f32 0.0, %v624
        %v626 = vpop.f32.mrb[0].mxu0
        %v627 = vpop.f32.mrb[0].mxu0
        %v628 = vadd.f32 0.0, %v627
        %v629 = vpop.f32.mrb[0].mxu0
        %630 = vmatprep.mubr.bf16.mxu0 0
        %631 = vmatmul.mubr.bf16.gmra.mrb[0].mxu0 %v554
        %v632 = vpop.f32.mrb[0].mxu0
        %v633 = vadd.f32 0.0, %v632
        %v634 = vpop.f32.mrb[0].mxu0
        %v635 = vpop.f32.mrb[0].mxu0
        %v636 = vadd.f32 0.0, %v635
        %v637 = vpop.f32.mrb[0].mxu0
        %638 = vmatprep.mubr.bf16.mxu0 0
        %639 = vmatmul.mubr.bf16.gmra.mrb[0].mxu0 %v555
        %v640 = vpop.f32.mrb[0].mxu0
        %v641 = vadd.f32 0.0, %v640
        %v642 = vpop.f32.mrb[0].mxu0
        %v643 = vpop.f32.mrb[0].mxu0
        %v644 = vadd.f32 0.0, %v643
        %v645 = vpop.f32.mrb[0].mxu0
        %646 = vmatprep.mubr.bf16.mxu0 0
        %647 = vmatmul.mubr.bf16.gmra.mrb[0].mxu0 %v556
        %v648 = vpop.f32.mrb[0].mxu0
        %v649 = vadd.f32 0.0, %v648
        %v650 = vpop.f32.mrb[0].mxu0
        %v651 = vpop.f32.mrb[0].mxu0
        %v652 = vadd.f32 0.0, %v651
        %v653 = vpop.f32.mrb[0].mxu0
        %654 = vmatprep.mubr.bf16.mxu0 0
        %655 = vmatmul.mubr.bf16.gmra.mrb[0].mxu0 %v557
        %v656 = vpop.f32.mrb[0].mxu0
        %v657 = vadd.f32 0.0, %v656
        %v658 = vpop.f32.mrb[0].mxu0
        %v659 = vpop.f32.mrb[0].mxu0
        %v660 = vadd.f32 0.0, %v659
        %v661 = vpop.f32.mrb[0].mxu0
        %662 = vdwg.mxu0
        %v663 = vadd.f32 %v478, %v601
        %v664 = vadd.f32 %v479, %v604
        %v665 = vadd.f32 %v480, %v609
        %v666 = vadd.f32 %v481, %v612
        %v667 = vadd.f32 %v482, %v617
        %v668 = vadd.f32 %v483, %v620
        %v669 = vadd.f32 %v484, %v625
        %v670 = vadd.f32 %v485, %v628
        %v671 = vadd.f32 %v486, %v633
        %v672 = vadd.f32 %v487, %v636
        %v673 = vadd.f32 %v488, %v641
        %v674 = vadd.f32 %v489, %v644
        %v675 = vadd.f32 %v490, %v649
        %v676 = vadd.f32 %v491, %v652
        %v677 = vadd.f32 %v492, %v657
        %v678 = vadd.f32 %v493, %v660
        %679 = vst [vmem:[%s247] sm:$0xff] %v663
        %680 = vst [vmem:[%s247 + $0x8] sm:$0xff] %v664
        %681 = vst [vmem:[%s247 + $0x10] sm:$0xff] %v665
        %682 = vst [vmem:[%s247 + $0x18] sm:$0xff] %v666
        %683 = vst [vmem:[%s247 + $0x20] sm:$0xff] %v667
        %684 = vst [vmem:[%s247 + $0x28] sm:$0xff] %v668
        %685 = vst [vmem:[%s247 + $0x30] sm:$0xff] %v669
        %686 = vst [vmem:[%s247 + $0x38] sm:$0xff] %v670
        %687 = vst [vmem:[%s247 + $0x40] sm:$0xff] %v671
        %688 = vst [vmem:[%s247 + $0x48] sm:$0xff] %v672
        %689 = vst [vmem:[%s247 + $0x50] sm:$0xff] %v673
        %690 = vst [vmem:[%s247 + $0x58] sm:$0xff] %v674
        %691 = vst [vmem:[%s247 + $0x60] sm:$0xff] %v675
        %692 = vst [vmem:[%s247 + $0x68] sm:$0xff] %v676
        %693 = vst [vmem:[%s247 + $0x70] sm:$0xff] %v677
        %694 = vst [vmem:[%s247 + $0x78] sm:$0xff] %v678
        %p695 = scmp.eq.s32.totalorder %s26, 2
        // Predicated region
        $region45: #{tpu_custom_call.1} parent=35 // pred_check
          %p696 = pneg %p695
        $region46: #{tpu_custom_call.1} parent=35 // pred_check_branch
          %698 = sbr.rel (%p696) target = $region48
        $region47: #{tpu_custom_call.1} parent=35 // pred_region
          %v699 = vld [vmem:[%s247] sm:$0xff]
          %v700 = vld [vmem:[%s247 + $0x8] sm:$0xff]
          %v701 = vld [vmem:[%s247 + $0x10] sm:$0xff]
          %v702 = vld [vmem:[%s247 + $0x18] sm:$0xff]
          %v703 = vld [vmem:[%s247 + $0x20] sm:$0xff]
          %v704 = vld [vmem:[%s247 + $0x28] sm:$0xff]
          %v705 = vld [vmem:[%s247 + $0x30] sm:$0xff]
          %v706 = vld [vmem:[%s247 + $0x38] sm:$0xff]
          %v707 = vld [vmem:[%s247 + $0x40] sm:$0xff]
          %v708 = vld [vmem:[%s247 + $0x48] sm:$0xff]
          %v709 = vld [vmem:[%s247 + $0x50] sm:$0xff]
          %v710 = vld [vmem:[%s247 + $0x58] sm:$0xff]
          %v711 = vld [vmem:[%s247 + $0x60] sm:$0xff]
          %v712 = vld [vmem:[%s247 + $0x68] sm:$0xff]
          %v713 = vld [vmem:[%s247 + $0x70] sm:$0xff]
          %v714 = vld [vmem:[%s247 + $0x78] sm:$0xff]
          %v715 = vmax.f32 %v699, 0.0
          %v716 = vmax.f32 %v700, 0.0
          %v717 = vmax.f32 %v701, 0.0
          %v718 = vmax.f32 %v702, 0.0
          %v719 = vmax.f32 %v703, 0.0
          %v720 = vmax.f32 %v704, 0.0
          %v721 = vmax.f32 %v705, 0.0
          %v722 = vmax.f32 %v706, 0.0
          %v723 = vmax.f32 %v707, 0.0
          %v724 = vmax.f32 %v708, 0.0
          %v725 = vmax.f32 %v709, 0.0
          %v726 = vmax.f32 %v710, 0.0
          %v727 = vmax.f32 %v711, 0.0
          %v728 = vmax.f32 %v712, 0.0
          %v729 = vmax.f32 %v713, 0.0
          %v730 = vmax.f32 %v714, 0.0
          %731 = vst [vmem:[%s247] sm:$0xff] %v715
          %732 = vst [vmem:[%s247 + $0x8] sm:$0xff] %v716
          %733 = vst [vmem:[%s247 + $0x10] sm:$0xff] %v717
          %734 = vst [vmem:[%s247 + $0x18] sm:$0xff] %v718
          %735 = vst [vmem:[%s247 + $0x20] sm:$0xff] %v719
          %736 = vst [vmem:[%s247 + $0x28] sm:$0xff] %v720
          %737 = vst [vmem:[%s247 + $0x30] sm:$0xff] %v721
          %738 = vst [vmem:[%s247 + $0x38] sm:$0xff] %v722
          %739 = vst [vmem:[%s247 + $0x40] sm:$0xff] %v723
          %740 = vst [vmem:[%s247 + $0x48] sm:$0xff] %v724
          %741 = vst [vmem:[%s247 + $0x50] sm:$0xff] %v725
          %742 = vst [vmem:[%s247 + $0x58] sm:$0xff] %v726
          %743 = vst [vmem:[%s247 + $0x60] sm:$0xff] %v727
          %744 = vst [vmem:[%s247 + $0x68] sm:$0xff] %v728
          %745 = vst [vmem:[%s247 + $0x70] sm:$0xff] %v729
          %746 = vst [vmem:[%s247 + $0x78] sm:$0xff] %v730
        $region48: #{tpu_custom_call.1} parent=35 // pred_fallthru
          _
        %s747 = sand.u32 %s137, 1
        %s748 = scalar_lea.sflag [#allocation4], %s747
        %s749 = sand.u32 %s137, 1
        %s750 = smul.addr %s749, 128
        %s751 = scalar_lea.vmem [#allocation5], %s750
        // Predicated region
        $region49: #{tpu_custom_call.1} parent=35 // pred_check
          %p752 = pneg %p147
        $region50: #{tpu_custom_call.1} parent=35 // pred_check_branch
          %754 = sbr.rel (%p752) target = $region52
        $region51: #{tpu_custom_call.1} parent=35 // pred_region
          %s755 = smul.u32 16, %s25
          %s757 = ssub.s32 2048, 2048
          %758 = vsyncadd %s748, %s757
          %s759 = smul.addr %s755, 128
          %s760 = scalar_lea.hbm %s4, %s759
          %s761 = sshll.u32 %s751, 4
          %s762 = int_to_ptr.vmem [resolvable:$true] %s761
          %767 = dma.vmem_to_hbm [thread:$0]  %s762, 2048, %s760, %s748, 128, 128, 8
        $region52: #{tpu_custom_call.1} parent=35 // pred_fallthru
          _
      $region36: #{tpu_custom_call.1} parent=5 // pred_fallthru
        _
      %p768 = scmp.le.s32.totalorder 2, %s16
      // Predicated region
      $region53: #{tpu_custom_call.1} parent=5 // pred_check
        %p769 = pneg %p768
      $region54: #{tpu_custom_call.1} parent=5 // pred_check_branch
        %771 = sbr.rel (%p769) target = $region56
      $region55: #{tpu_custom_call.1} parent=5 // pred_region
        %s772 = ssub.s32 %s16, 2
        // Predicated region
        $region57: #{tpu_custom_call.1} parent=55 // pred_check
          %p773 = pneg %p153
        $region58: #{tpu_custom_call.1} parent=55 // pred_check_branch
          %775 = sbr.rel (%p773) target = $region60
        $region59: #{tpu_custom_call.1} parent=55 // pred_region
          %s776 = sand.u32 %s138, 1
          %s777 = scalar_lea.sflag [#allocation4], %s776
          %s778 = sand.u32 %s138, 1
          %s779 = smul.addr %s778, 128
          %s780 = scalar_lea.vmem [#allocation5], %s779
          %781 = dma.done %s777, 2048
        $region60: #{tpu_custom_call.1} parent=55 // pred_fallthru
          _
      $region56: #{tpu_custom_call.1} parent=5 // pred_fallthru
        _
    $region6: #{tpu_custom_call.1} parent=1 // loop_footer
      %s20 = sadd.s32 1, %s16
    $region7: #{tpu_custom_call.1} parent=1 // loop_footer_branch
      %15 = sbr.rel target = $region3
    $region8: #{tpu_custom_call.1} parent=1 // loop_exit
      _
    %782 = vsyncpa [#allocation3], 1
    %s783 = scalar_lea.sflag [#allocation3], 1
    %784 = vsyncpa %s783, 1
    %785 = vsyncpa [#allocation4], 1
    %s786 = scalar_lea.sflag [#allocation4], 1
    %787 = vsyncpa %s786, 1

</llo_original>
